<compile_context>
chip_gen: v7x
topology: tpu7x:2x2x1
jax: 0.10.0
libtpu: 0.0.40
codegen_flags: <defaults>
</compile_context>

<pallas_src>
import functools

import jax
import jax.numpy as jnp
from jax.experimental import pallas as pl
from jax.experimental.pallas import tpu as pltpu

IN_F = 54            # raw input feature width
PAD = 128            # padded hidden width (lanes)
DEFAULT_TILE_B = 2048


def _round_up(n, m):
    return ((n + m - 1) // m) * m


def rubiks_kernel(x_ref,
                  w1_ref, b1_ref,
                  w2_ref, b2_ref,
                  wr1_ref, br1_ref,
                  wr2_ref, br2_ref,
                  w3_ref, b3_ref,
                  o_ref):
    # x tile: (tb, 54) f32 -> cast to bf16 in-kernel (VPU work, hides under MXU)
    x = x_ref[...].astype(jnp.bfloat16)

    # fc1 + relu: K=54 bf16 matmul (Mosaic pads the contraction dim), f32 acc.
    h = jnp.dot(x, w1_ref[...], preferred_element_type=jnp.float32) + b1_ref[...]
    h = jnp.maximum(h, 0.0)

    # fc2 + relu
    h = jnp.dot(h.astype(jnp.bfloat16), w2_ref[...],
                preferred_element_type=jnp.float32) + b2_ref[...]
    h = jnp.maximum(h, 0.0)

    # ResidLayer: relu(fc2(relu(fc1(h))) + h), residual add kept in f32.
    identity = h
    r = jnp.dot(h.astype(jnp.bfloat16), wr1_ref[...],
                preferred_element_type=jnp.float32) + br1_ref[...]
    r = jnp.maximum(r, 0.0)
    r = jnp.dot(r.astype(jnp.bfloat16), wr2_ref[...],
                preferred_element_type=jnp.float32) + br2_ref[...]
    r = jnp.maximum(r + identity, 0.0)

    # fc3 head (1 unit): VPU multiply + XLU lane reduction instead of an N=1
    # MXU matmul. Padded lanes of w3 are zero so they contribute nothing.
    o_ref[...] = (jnp.sum(r * w3_ref[...], axis=-1, keepdims=True)
                  + b3_ref[0])


@functools.partial(jax.jit, static_argnames=("tile_b",))
def rubiks_network(x, pp, tile_b=DEFAULT_TILE_B):
    """x: (B, 54) float32.  pp: padded params from pad_params()."""
    B, f_in = x.shape
    assert f_in == IN_F

    # Choose the batch tiling:
    #  * at most ~tile_b rows per step (big tiles amortize per-step overhead),
    #  * at least 2 grid steps when the batch allows it (both v7x TCs busy),
    #  * tile sized relative to B so padding waste is <= 7 rows.
    b8 = _round_up(B, 8)
    min_steps = 2 if b8 >= 16 else 1
    n_steps = max(pl.cdiv(b8, tile_b), min_steps)
    tb = _round_up(pl.cdiv(b8, n_steps), 8)
    b_pad = tb * n_steps

    # Only the batch axis gets padded (f32, 54 lanes); the lane pad + bf16
    # cast happen inside the kernel, saving an HBM pass over the input.
    if b_pad != B:
        xp = jnp.zeros((b_pad, IN_F), x.dtype).at[:B].set(x)
    else:
        xp = x

    w_spec = pl.BlockSpec((PAD, PAD), lambda i: (0, 0))    # resident weights
    w1_spec = pl.BlockSpec((IN_F, PAD), lambda i: (0, 0))  # fc1 weight, K=54
    b_spec = pl.BlockSpec((1, PAD), lambda i: (0, 0))      # resident biases

    param_bytes = sum(int(v.size) * v.dtype.itemsize for v in pp.values())
    cost = pl.CostEstimate(
        flops=int(b_pad) * 2 * (IN_F * PAD + 3 * PAD * PAD + PAD),
        transcendentals=0,
        bytes_accessed=int(xp.size) * 4 + param_bytes + int(b_pad) * 4,
    )

    out = pl.pallas_call(
        rubiks_kernel,
        out_shape=jax.ShapeDtypeStruct((b_pad, 1), jnp.float32),
        grid=(n_steps,),
        in_specs=[
            pl.BlockSpec((tb, IN_F), lambda i: (i, 0)),    # x tile (pipelined)
            w1_spec, b_spec,                               # fc1
            w_spec, b_spec,                                # fc2
            w_spec, b_spec,                                # r1.fc1
            w_spec, b_spec,                                # r1.fc2
            b_spec,                                        # w3 as (1,128) row
            pl.BlockSpec(memory_space=pltpu.MemorySpace.SMEM),  # b3 scalar
        ],
        out_specs=pl.BlockSpec((tb, 1), lambda i: (i, 0)),
        compiler_params=pltpu.CompilerParams(
            dimension_semantics=("parallel",),
            vmem_limit_bytes=48 * 1024 * 1024),
        cost_estimate=cost,
    )(xp,
      pp["w1"], pp["b1"], pp["w2"], pp["b2"],
      pp["wr1"], pp["br1"], pp["wr2"], pp["br2"],
      pp["w3row"], pp["b3"])
    return out[:B]


def init_params(key):
    """Deterministic synthetic parameters matching nn.Linear shapes.

    PyTorch layers: fc1 (100,54), fc2 (100,100), r1.fc1 (100,100),
    r1.fc2 (100,100), fc3 (1,100). Stored here in transposed (in, out) form.
    """
    def linear(k, fan_in, fan_out):
        kw, kb = jax.random.split(k)
        bound = 1.0 / jnp.sqrt(jnp.float32(fan_in))
        w = jax.random.uniform(kw, (fan_in, fan_out), jnp.float32, -bound, bound)
        b = jax.random.uniform(kb, (1, fan_out), jnp.float32, -bound, bound)
        return w, b

    ks = jax.random.split(key, 5)
    w1, b1 = linear(ks[0], 54, 100)
    w2, b2 = linear(ks[1], 100, 100)
    wr1, br1 = linear(ks[2], 100, 100)
    wr2, br2 = linear(ks[3], 100, 100)
    w3, b3 = linear(ks[4], 100, 1)
    return dict(w1=w1, b1=b1, w2=w2, b2=b2,
                wr1=wr1, br1=br1, wr2=wr2, br2=br2,
                w3=w3, b3=b3)


def pad_params(p):
    """Zero-pad hidden dims to 128 lanes, cast matmul weights to bf16.

    fc1's weight keeps its natural 54-row contraction dim (the kernel runs a
    K=54 matmul); all padded lanes are exactly zero so they stay zero through
    every relu/residual layer.
    """
    def pad_out_only(w):          # (fi, fo) -> (fi, 128) bf16
        fi, fo = w.shape
        return (jnp.zeros((fi, PAD), jnp.float32)
                .at[:, :fo].set(w).astype(jnp.bfloat16))

    def pad_full(w):              # (fi, fo) -> (128, 128) bf16
        fi, fo = w.shape
        return (jnp.zeros((PAD, PAD), jnp.float32)
                .at[:fi, :fo].set(w).astype(jnp.bfloat16))

    def pad_b(b):                 # (1, fo) -> (1, 128) f32
        return jnp.zeros((1, PAD), jnp.float32).at[:, :b.shape[1]].set(b)

    w3row = (jnp.zeros((1, PAD), jnp.float32)
             .at[0, :p["w3"].shape[0]].set(p["w3"][:, 0]))
    return dict(
        w1=pad_out_only(p["w1"]), b1=pad_b(p["b1"]),
        w2=pad_full(p["w2"]), b2=pad_b(p["b2"]),
        wr1=pad_full(p["wr1"]), br1=pad_b(p["br1"]),
        wr2=pad_full(p["wr2"]), br2=pad_b(p["br2"]),
        w3row=w3row,
        b3=p["b3"].reshape(-1).astype(jnp.float32),   # (1,) scalar in SMEM
    )


def rubiks_network_ref_f32(x, p):
    """Pure-JAX f32 reference mirroring the PyTorch forward."""
    h = jax.nn.relu(x @ p["w1"] + p["b1"])
    h = jax.nn.relu(h @ p["w2"] + p["b2"])
    identity = h
    r = jax.nn.relu(h @ p["wr1"] + p["br1"])
    r = jax.nn.relu(r @ p["wr2"] + p["br2"] + identity)
    return r @ p["w3"] + p["b3"]


def rubiks_network_ref_bf16(x, p):
    """Pure-JAX reference with the same bf16-input / f32-accumulate matmuls
    as the kernel (head stays f32), for a tight numerical check."""
    bf = jnp.bfloat16

    def mm(a, w):
        return jnp.dot(a.astype(bf), w.astype(bf),
                       preferred_element_type=jnp.float32)

    h = jax.nn.relu(mm(x, p["w1"]) + p["b1"])
    h = jax.nn.relu(mm(h, p["w2"]) + p["b2"])
    identity = h
    r = jax.nn.relu(mm(h, p["wr1"]) + p["br1"])
    r = jax.nn.relu(mm(r, p["wr2"]) + p["br2"] + identity)
    return jnp.dot(r, p["w3"], preferred_element_type=jnp.float32) + p["b3"]


if __name__ == "__main__":
    key = jax.random.PRNGKey(0)
    kx, kp = jax.random.split(key)

    batch = 16
    x = jax.random.normal(kx, (batch, 54), jnp.float32)
    params = init_params(kp)
    padded = pad_params(params)

    out = rubiks_network(x, padded)
    out = jax.block_until_ready(out)
    assert out.shape == (batch, 1), out.shape

    # Tight check vs a reference using identical bf16-input matmuls.
    ref_bf = rubiks_network_ref_bf16(x, params)
    assert jnp.allclose(out, ref_bf, atol=1e-2, rtol=1e-2), (
        float(jnp.max(jnp.abs(out - ref_bf))))

    # Loose sanity check vs the full-f32 PyTorch-equivalent forward.
    ref_f32 = rubiks_network_ref_f32(x, params)
    assert jnp.allclose(out, ref_f32, atol=5e-2, rtol=5e-2), (
        float(jnp.max(jnp.abs(out - ref_f32))))

    print("KERNEL_OK")
</pallas_src>

<mosaic_0001>
module attributes {stable_mosaic.version = 11 : i64} {
  func.func @rubiks_kernel(%arg0: i32, %arg1: memref<8x54xf32, #tpu.memory_space<vmem>>, %arg2: memref<54x128xbf16, #tpu.memory_space<vmem>>, %arg3: memref<1x128xf32, #tpu.memory_space<vmem>>, %arg4: memref<128x128xbf16, #tpu.memory_space<vmem>>, %arg5: memref<1x128xf32, #tpu.memory_space<vmem>>, %arg6: memref<128x128xbf16, #tpu.memory_space<vmem>>, %arg7: memref<1x128xf32, #tpu.memory_space<vmem>>, %arg8: memref<128x128xbf16, #tpu.memory_space<vmem>>, %arg9: memref<1x128xf32, #tpu.memory_space<vmem>>, %arg10: memref<1x128xf32, #tpu.memory_space<vmem>>, %arg11: memref<1xf32, #tpu.memory_space<smem>>, %arg12: memref<8x1xf32, #tpu.memory_space<vmem>>) attributes {dimension_semantics = [#tpu.dimension_semantics<parallel>], iteration_bounds = array<i64: 2>, scalar_prefetch = 0 : i64, scratch_operands = 0 : i64, tpu.core_type = #tpu.core_type<tc>, window_params = [{transform_indices = @transform_0, window_bounds = array<i64: 8, 54>}, {pipeline_mode = #tpu.pipeline_mode<synchronous>, transform_indices = @transform_1, window_bounds = array<i64: 54, 128>}, {pipeline_mode = #tpu.pipeline_mode<synchronous>, transform_indices = @transform_2, window_bounds = array<i64: 1, 128>}, {pipeline_mode = #tpu.pipeline_mode<synchronous>, transform_indices = @transform_3, window_bounds = array<i64: 128, 128>}, {pipeline_mode = #tpu.pipeline_mode<synchronous>, transform_indices = @transform_4, window_bounds = array<i64: 1, 128>}, {pipeline_mode = #tpu.pipeline_mode<synchronous>, transform_indices = @transform_5, window_bounds = array<i64: 128, 128>}, {pipeline_mode = #tpu.pipeline_mode<synchronous>, transform_indices = @transform_6, window_bounds = array<i64: 1, 128>}, {pipeline_mode = #tpu.pipeline_mode<synchronous>, transform_indices = @transform_7, window_bounds = array<i64: 128, 128>}, {pipeline_mode = #tpu.pipeline_mode<synchronous>, transform_indices = @transform_8, window_bounds = array<i64: 1, 128>}, {pipeline_mode = #tpu.pipeline_mode<synchronous>, transform_indices = @transform_9, window_bounds = array<i64: 1, 128>}, {transform_indices = @transform_10, window_bounds = array<i64: 1>}, {transform_indices = @transform_11, window_bounds = array<i64: 8, 1>}]} {
    %c0 = arith.constant 0 : index
    %c0_0 = arith.constant 0 : index
    %0 = vector.load %arg1[%c0, %c0_0] : memref<8x54xf32, #tpu.memory_space<vmem>>, vector<8x54xf32>
    %1 = arith.truncf %0 : vector<8x54xf32> to vector<8x54xbf16>
    %c0_1 = arith.constant 0 : index
    %c0_2 = arith.constant 0 : index
    %2 = vector.load %arg2[%c0_1, %c0_2] : memref<54x128xbf16, #tpu.memory_space<vmem>>, vector<54x128xbf16>
    %cst = arith.constant dense<0.000000e+00> : vector<8x128xf32>
    %3 = tpu.matmul %1, %2, %cst {dimension_numbers = #tpu.dot_dimension_numbers<[1], [0], [0], [1], [0, 0, 1, 1], [], []>} : vector<8x54xbf16>, vector<54x128xbf16>, vector<8x128xf32> -> vector<8x128xf32>
    %c0_3 = arith.constant 0 : index
    %c0_4 = arith.constant 0 : index
    %4 = vector.load %arg3[%c0_3, %c0_4] : memref<1x128xf32, #tpu.memory_space<vmem>>, vector<1x128xf32>
    %5 = vector.broadcast %4 : vector<1x128xf32> to vector<8x128xf32>
    %6 = arith.addf %3, %5 : vector<8x128xf32>
    %cst_5 = arith.constant 0.000000e+00 : f32
    %7 = vector.broadcast %cst_5 : f32 to vector<8x128xf32>
    %8 = arith.maximumf %6, %7 : vector<8x128xf32>
    %9 = arith.truncf %8 : vector<8x128xf32> to vector<8x128xbf16>
    %c0_6 = arith.constant 0 : index
    %c0_7 = arith.constant 0 : index
    %10 = vector.load %arg4[%c0_6, %c0_7] : memref<128x128xbf16, #tpu.memory_space<vmem>>, vector<128x128xbf16>
    %cst_8 = arith.constant dense<0.000000e+00> : vector<8x128xf32>
    %11 = tpu.matmul %9, %10, %cst_8 {dimension_numbers = #tpu.dot_dimension_numbers<[1], [0], [0], [1], [0, 0, 1, 1], [], []>} : vector<8x128xbf16>, vector<128x128xbf16>, vector<8x128xf32> -> vector<8x128xf32>
    %c0_9 = arith.constant 0 : index
    %c0_10 = arith.constant 0 : index
    %12 = vector.load %arg5[%c0_9, %c0_10] : memref<1x128xf32, #tpu.memory_space<vmem>>, vector<1x128xf32>
    %13 = vector.broadcast %12 : vector<1x128xf32> to vector<8x128xf32>
    %14 = arith.addf %11, %13 : vector<8x128xf32>
    %cst_11 = arith.constant 0.000000e+00 : f32
    %15 = vector.broadcast %cst_11 : f32 to vector<8x128xf32>
    %16 = arith.maximumf %14, %15 : vector<8x128xf32>
    %17 = arith.truncf %16 : vector<8x128xf32> to vector<8x128xbf16>
    %c0_12 = arith.constant 0 : index
    %c0_13 = arith.constant 0 : index
    %18 = vector.load %arg6[%c0_12, %c0_13] : memref<128x128xbf16, #tpu.memory_space<vmem>>, vector<128x128xbf16>
    %cst_14 = arith.constant dense<0.000000e+00> : vector<8x128xf32>
    %19 = tpu.matmul %17, %18, %cst_14 {dimension_numbers = #tpu.dot_dimension_numbers<[1], [0], [0], [1], [0, 0, 1, 1], [], []>} : vector<8x128xbf16>, vector<128x128xbf16>, vector<8x128xf32> -> vector<8x128xf32>
    %c0_15 = arith.constant 0 : index
    %c0_16 = arith.constant 0 : index
    %20 = vector.load %arg7[%c0_15, %c0_16] : memref<1x128xf32, #tpu.memory_space<vmem>>, vector<1x128xf32>
    %21 = vector.broadcast %20 : vector<1x128xf32> to vector<8x128xf32>
    %22 = arith.addf %19, %21 : vector<8x128xf32>
    %cst_17 = arith.constant 0.000000e+00 : f32
    %23 = vector.broadcast %cst_17 : f32 to vector<8x128xf32>
    %24 = arith.maximumf %22, %23 : vector<8x128xf32>
    %25 = arith.truncf %24 : vector<8x128xf32> to vector<8x128xbf16>
    %c0_18 = arith.constant 0 : index
    %c0_19 = arith.constant 0 : index
    %26 = vector.load %arg8[%c0_18, %c0_19] : memref<128x128xbf16, #tpu.memory_space<vmem>>, vector<128x128xbf16>
    %cst_20 = arith.constant dense<0.000000e+00> : vector<8x128xf32>
    %27 = tpu.matmul %25, %26, %cst_20 {dimension_numbers = #tpu.dot_dimension_numbers<[1], [0], [0], [1], [0, 0, 1, 1], [], []>} : vector<8x128xbf16>, vector<128x128xbf16>, vector<8x128xf32> -> vector<8x128xf32>
    %c0_21 = arith.constant 0 : index
    %c0_22 = arith.constant 0 : index
    %28 = vector.load %arg9[%c0_21, %c0_22] : memref<1x128xf32, #tpu.memory_space<vmem>>, vector<1x128xf32>
    %29 = vector.broadcast %28 : vector<1x128xf32> to vector<8x128xf32>
    %30 = arith.addf %27, %29 : vector<8x128xf32>
    %31 = arith.addf %30, %16 : vector<8x128xf32>
    %cst_23 = arith.constant 0.000000e+00 : f32
    %32 = vector.broadcast %cst_23 : f32 to vector<8x128xf32>
    %33 = arith.maximumf %31, %32 : vector<8x128xf32>
    %c0_24 = arith.constant 0 : index
    %c0_25 = arith.constant 0 : index
    %34 = vector.load %arg10[%c0_24, %c0_25] : memref<1x128xf32, #tpu.memory_space<vmem>>, vector<1x128xf32>
    %35 = vector.broadcast %34 : vector<1x128xf32> to vector<8x128xf32>
    %36 = arith.mulf %33, %35 : vector<8x128xf32>
    %cst_26 = arith.constant dense<0.000000e+00> : vector<8xf32>
    %37 = vector.multi_reduction <add>, %36, %cst_26 [1] : vector<8x128xf32> to vector<8xf32>
    %38 = vector.shape_cast %37 : vector<8xf32> to vector<8x1xf32>
    %c0_27 = arith.constant 0 : index
    %39 = memref.load %arg11[%c0_27] : memref<1xf32, #tpu.memory_space<smem>>
    %40 = vector.broadcast %39 : f32 to vector<8x1xf32>
    %41 = arith.addf %38, %40 : vector<8x1xf32>
    %c0_28 = arith.constant 0 : index
    %c0_29 = arith.constant 0 : index
    %42 = vector.load %arg12[%c0_28, %c0_29] : memref<8x1xf32, #tpu.memory_space<vmem>>, vector<8x1xf32>
    tpu.vector_store %arg12[%c0_28, %c0_29], %41 {strides = array<i32>} : memref<8x1xf32, #tpu.memory_space<vmem>>, vector<8x1xf32>,
    return
  }
  func.func @transform_0(%arg0: i32) -> (i32, i32) {
    %c0_i32 = arith.constant 0 : i32
    %c0_i32_0 = arith.constant 0 : i32
    return %arg0, %c0_i32 : i32, i32
  }
  func.func @transform_1(%arg0: i32) -> (i32, i32) {
    %c0_i32 = arith.constant 0 : i32
    %c0_i32_0 = arith.constant 0 : i32
    %c0_i32_1 = arith.constant 0 : i32
    return %c0_i32, %c0_i32_0 : i32, i32
  }
  func.func @transform_2(%arg0: i32) -> (i32, i32) {
    %c0_i32 = arith.constant 0 : i32
    %c0_i32_0 = arith.constant 0 : i32
    %c0_i32_1 = arith.constant 0 : i32
    return %c0_i32, %c0_i32_0 : i32, i32
  }
  func.func @transform_3(%arg0: i32) -> (i32, i32) {
    %c0_i32 = arith.constant 0 : i32
    %c0_i32_0 = arith.constant 0 : i32
    %c0_i32_1 = arith.constant 0 : i32
    return %c0_i32, %c0_i32_0 : i32, i32
  }
  func.func @transform_4(%arg0: i32) -> (i32, i32) {
    %c0_i32 = arith.constant 0 : i32
    %c0_i32_0 = arith.constant 0 : i32
    %c0_i32_1 = arith.constant 0 : i32
    return %c0_i32, %c0_i32_0 : i32, i32
  }
  func.func @transform_5(%arg0: i32) -> (i32, i32) {
    %c0_i32 = arith.constant 0 : i32
    %c0_i32_0 = arith.constant 0 : i32
    %c0_i32_1 = arith.constant 0 : i32
    return %c0_i32, %c0_i32_0 : i32, i32
  }
  func.func @transform_6(%arg0: i32) -> (i32, i32) {
    %c0_i32 = arith.constant 0 : i32
    %c0_i32_0 = arith.constant 0 : i32
    %c0_i32_1 = arith.constant 0 : i32
    return %c0_i32, %c0_i32_0 : i32, i32
  }
  func.func @transform_7(%arg0: i32) -> (i32, i32) {
    %c0_i32 = arith.constant 0 : i32
    %c0_i32_0 = arith.constant 0 : i32
    %c0_i32_1 = arith.constant 0 : i32
    return %c0_i32, %c0_i32_0 : i32, i32
  }
  func.func @transform_8(%arg0: i32) -> (i32, i32) {
    %c0_i32 = arith.constant 0 : i32
    %c0_i32_0 = arith.constant 0 : i32
    %c0_i32_1 = arith.constant 0 : i32
    return %c0_i32, %c0_i32_0 : i32, i32
  }
  func.func @transform_9(%arg0: i32) -> (i32, i32) {
    %c0_i32 = arith.constant 0 : i32
    %c0_i32_0 = arith.constant 0 : i32
    %c0_i32_1 = arith.constant 0 : i32
    return %c0_i32, %c0_i32_0 : i32, i32
  }
  func.func @transform_10(%arg0: i32) -> i32 {
    %c0_i32 = arith.constant 0 : i32
    %c0_i32_0 = arith.constant 0 : i32
    return %c0_i32 : i32
  }
  func.func @transform_11(%arg0: i32) -> (i32, i32) {
    %c0_i32 = arith.constant 0 : i32
    %c0_i32_0 = arith.constant 0 : i32
    return %arg0, %c0_i32 : i32, i32
  }
}

</mosaic_0001>

<llo_original>
// kernel: rubiks_network.1
$region0: #{rubiks_network.1}
  #allocation0 [shape = 'u32[]', space=smem, size = 0x4, offset = 0x4, fixed_abs, tag = 'smem constant byte address 0x4 - core index']
  #allocation1 [shape = 'u32[144,128]{1,0:T(1,128)}', space=vmem, size = 0x12000, scoped, tag = 'internal scratch']
  #allocation2 [shape = 'f32[1]{0:T(128)S(6)}', space=smem, size = 0x200, scoped, tag = 'scoped memory for rubiks_network.1']
  %s0 = inlined_call_operand.hbm [shape: f32[16,54], index: 0, kind: input, shape index: {}]
  %s1 = inlined_call_operand.hbm [shape: bf16[54,128], index: 1, kind: input, shape index: {}]
  %s2 = inlined_call_operand.vmem [shape: f32[1,128], index: 2, kind: input, shape index: {}]
  %s3 = inlined_call_operand.hbm [shape: bf16[128,128], index: 3, kind: input, shape index: {}]
  %s4 = inlined_call_operand.vmem [shape: f32[1,128], index: 4, kind: input, shape index: {}]
  %s5 = inlined_call_operand.hbm [shape: bf16[128,128], index: 5, kind: input, shape index: {}]
  %s6 = inlined_call_operand.vmem [shape: f32[1,128], index: 6, kind: input, shape index: {}]
  %s7 = inlined_call_operand.hbm [shape: bf16[128,128], index: 7, kind: input, shape index: {}]
  %s8 = inlined_call_operand.vmem [shape: f32[1,128], index: 8, kind: input, shape index: {}]
  %s9 = inlined_call_operand.vmem [shape: f32[1,128], index: 9, kind: input, shape index: {}]
  %s10 = inlined_call_operand.<no memory space> [shape: f32[1], index: 10, kind: input, shape index: {}]
  %s11 = inlined_call_operand.vmem [shape: f32[16,1], index: 11, kind: output, shape index: {}]
  %s12 = sld [smem:[#allocation0]]
  $region97: #{rubiks_network.1} parent=0
    _
  %s14 = ssub.s32 1, %s12
  %s15 = scalar_select 0, %s14, %s12
  %16 = sst [smem:[#allocation2]] %s10
  $region1: #{rubiks_network.1} parent=0
    #allocation3 [shape = 'u8[8192]{0}', space=vmem, size = 0x2000, scoped, tag = 'input window, operand 0']
    #allocation4 [shape = 's32[2]{0}', space=sflag, size = 0x8, scoped, tag = 'scoped memory for rubiks_network.1']
    #allocation5 [shape = 'u8[14336]{0}', space=vmem, size = 0x3800, scoped, tag = 'input window, operand 1, single buffered']
    #allocation6 [shape = 's32[1]{0}', space=sflag, size = 0x4, scoped, tag = 'scoped memory for rubiks_network.1']
    #allocation7 [shape = 'u8[32768]{0}', space=vmem, size = 0x8000, scoped, tag = 'input window, operand 3, single buffered']
    #allocation8 [shape = 'u8[32768]{0}', space=vmem, size = 0x8000, scoped, tag = 'input window, operand 5, single buffered']
    #allocation9 [shape = 's32[1]{0}', space=sflag, size = 0x4, scoped, tag = 'scoped memory for rubiks_network.1']
    #allocation10 [shape = 'u8[32768]{0}', space=vmem, size = 0x8000, scoped, tag = 'input window, operand 7, single buffered']
    %17 = vsyncpa [#allocation4], 0
    %s18 = scalar_lea.sflag [#allocation4], 1
    %19 = vsyncpa %s18, 0
    %20 = vsyncpa [#allocation6], 0
    %21 = vsyncpa [#allocation9], 0
    loop: start=0, step=1, limit=4
    $region2: #{rubiks_network.1} parent=1 // loop_pre_header
      _
    $region3: #{rubiks_network.1} parent=1 // loop_header
      %s23 = sphi 0, %s27
      %p24 = scmp.ge.s32.totalorder %s23, 4
      %s33 = sphi 0, %s35
      %s36 = sphi 0, %s33
      %s37 = sphi 0, %s36
      %s53 = sphi 0, %s37
      %s57 = sphi 0, %s57
      %s59 = sphi 0, %s57
      %s60 = sphi 0, %s59
      %s74 = sphi 0, %s60
      %s78 = sphi 0, %s78
      %s80 = sphi 0, %s78
      %s81 = sphi 0, %s80
      %s95 = sphi 0, %s81
      %s99 = sphi 0, %s99
      %s101 = sphi 0, %s99
      %s102 = sphi 0, %s101
      %s116 = sphi 0, %s102
      %s120 = sphi 0, %s120
      %s122 = sphi 0, %s120
      %s123 = sphi 0, %s122
      %s137 = sphi 0, %s123
      %s141 = sphi 0, %s141
      %s143 = sphi 0, %s141
      %s144 = sphi 0, %s143
      %s158 = sphi 0, %s144
      %s162 = sphi 0, %s162
      %s164 = sphi 0, %s162
      %s165 = sphi 0, %s164
      %s179 = sphi 0, %s165
      %s183 = sphi 0, %s183
      %s185 = sphi 0, %s183
      %s186 = sphi 0, %s185
      %s200 = sphi 0, %s186
      %s204 = sphi 0, %s204
      %s206 = sphi 0, %s204
      %s207 = sphi 0, %s206
      %s221 = sphi 0, %s207
      %s225 = sphi 0, %s225
      %s227 = sphi 0, %s225
      %s228 = sphi 0, %s227
      %s242 = sphi 0, %s228
      %s246 = sphi 0, %s246
      %s248 = sphi 0, %s246
      %s249 = sphi 0, %s248
      %s263 = sphi 0, %s249
      %s269 = sphi 0, %s271
      %s272 = sphi 0, %s269
      %s273 = sphi 0, %s272
      %s289 = sphi 0, %s273
    $region4: #{rubiks_network.1} parent=1 // loop_header_branch
      %26 = sbr.rel (%p24) target = $region8
    $region5: #{rubiks_network.1} parent=1 // loop_body
      %s28 = ssub.s32 %s23, 1
      %s29 = ssub.s32 %s23, 2
      %s30 = sadd.s32 %s23, 1
      %s31 = ssub.s32 %s23, %s30
      %p32 = scmp.eq.s32.totalorder %s31, 0
      %s34 = sadd.s32 %s33, 1
      %s35 = scalar_select %p32, %s33, %s34
      %p38 = pneg %p32
      %p39 = scmp.eq.s32.totalorder %s23, 1
      %p40 = por %p38, %p39
      %p41 = scmp.ne.s32.totalorder %s33, %s36
      %p42 = scmp.eq.s32.totalorder %s23, 0
      %p43 = por %p41, %p42
      %p44 = scmp.ne.s32.totalorder %s33, %s36
      %p45 = scmp.eq.s32.totalorder %s28, 1
      %p46 = por %p44, %p45
      %p47 = scmp.ne.s32.totalorder %s36, %s37
      %p48 = scmp.eq.s32.totalorder %s28, 0
      %p49 = por %p47, %p48
      %p50 = scmp.ne.s32.totalorder %s36, %s37
      %p51 = scmp.eq.s32.totalorder %s29, 1
      %p52 = por %p50, %p51
      %p54 = scmp.ne.s32.totalorder %s37, %s53
      %p55 = scmp.eq.s32.totalorder %s29, 0
      %p56 = por %p54, %p55
      %s58 = sadd.s32 %s57, 1
      %p61 = scmp.eq.s32.totalorder %s23, 1
      %p62 = scmp.ne.s32.totalorder %s57, %s59
      %p63 = scmp.eq.s32.totalorder %s23, 0
      %p64 = por %p62, %p63
      %p65 = scmp.ne.s32.totalorder %s57, %s59
      %p66 = scmp.eq.s32.totalorder %s28, 1
      %p67 = por %p65, %p66
      %p68 = scmp.ne.s32.totalorder %s59, %s60
      %p69 = scmp.eq.s32.totalorder %s28, 0
      %p70 = por %p68, %p69
      %p71 = scmp.ne.s32.totalorder %s59, %s60
      %p72 = scmp.eq.s32.totalorder %s29, 1
      %p73 = por %p71, %p72
      %p75 = scmp.ne.s32.totalorder %s60, %s74
      %p76 = scmp.eq.s32.totalorder %s29, 0
      %p77 = por %p75, %p76
      %s79 = sadd.s32 %s78, 1
      %p82 = scmp.eq.s32.totalorder %s23, 1
      %p83 = scmp.ne.s32.totalorder %s78, %s80
      %p84 = scmp.eq.s32.totalorder %s23, 0
      %p85 = por %p83, %p84
      %p86 = scmp.ne.s32.totalorder %s78, %s80
      %p87 = scmp.eq.s32.totalorder %s28, 1
      %p88 = por %p86, %p87
      %p89 = scmp.ne.s32.totalorder %s80, %s81
      %p90 = scmp.eq.s32.totalorder %s28, 0
      %p91 = por %p89, %p90
      %p92 = scmp.ne.s32.totalorder %s80, %s81
      %p93 = scmp.eq.s32.totalorder %s29, 1
      %p94 = por %p92, %p93
      %p96 = scmp.ne.s32.totalorder %s81, %s95
      %p97 = scmp.eq.s32.totalorder %s29, 0
      %p98 = por %p96, %p97
      %s100 = sadd.s32 %s99, 1
      %p103 = scmp.eq.s32.totalorder %s23, 1
      %p104 = scmp.ne.s32.totalorder %s99, %s101
      %p105 = scmp.eq.s32.totalorder %s23, 0
      %p106 = por %p104, %p105
      %p107 = scmp.ne.s32.totalorder %s99, %s101
      %p108 = scmp.eq.s32.totalorder %s28, 1
      %p109 = por %p107, %p108
      %p110 = scmp.ne.s32.totalorder %s101, %s102
      %p111 = scmp.eq.s32.totalorder %s28, 0
      %p112 = por %p110, %p111
      %p113 = scmp.ne.s32.totalorder %s101, %s102
      %p114 = scmp.eq.s32.totalorder %s29, 1
      %p115 = por %p113, %p114
      %p117 = scmp.ne.s32.totalorder %s102, %s116
      %p118 = scmp.eq.s32.totalorder %s29, 0
      %p119 = por %p117, %p118
      %s121 = sadd.s32 %s120, 1
      %p124 = scmp.eq.s32.totalorder %s23, 1
      %p125 = scmp.ne.s32.totalorder %s120, %s122
      %p126 = scmp.eq.s32.totalorder %s23, 0
      %p127 = por %p125, %p126
      %p128 = scmp.ne.s32.totalorder %s120, %s122
      %p129 = scmp.eq.s32.totalorder %s28, 1
      %p130 = por %p128, %p129
      %p131 = scmp.ne.s32.totalorder %s122, %s123
      %p132 = scmp.eq.s32.totalorder %s28, 0
      %p133 = por %p131, %p132
      %p134 = scmp.ne.s32.totalorder %s122, %s123
      %p135 = scmp.eq.s32.totalorder %s29, 1
      %p136 = por %p134, %p135
      %p138 = scmp.ne.s32.totalorder %s123, %s137
      %p139 = scmp.eq.s32.totalorder %s29, 0
      %p140 = por %p138, %p139
      %s142 = sadd.s32 %s141, 1
      %p145 = scmp.eq.s32.totalorder %s23, 1
      %p146 = scmp.ne.s32.totalorder %s141, %s143
      %p147 = scmp.eq.s32.totalorder %s23, 0
      %p148 = por %p146, %p147
      %p149 = scmp.ne.s32.totalorder %s141, %s143
      %p150 = scmp.eq.s32.totalorder %s28, 1
      %p151 = por %p149, %p150
      %p152 = scmp.ne.s32.totalorder %s143, %s144
      %p153 = scmp.eq.s32.totalorder %s28, 0
      %p154 = por %p152, %p153
      %p155 = scmp.ne.s32.totalorder %s143, %s144
      %p156 = scmp.eq.s32.totalorder %s29, 1
      %p157 = por %p155, %p156
      %p159 = scmp.ne.s32.totalorder %s144, %s158
      %p160 = scmp.eq.s32.totalorder %s29, 0
      %p161 = por %p159, %p160
      %s163 = sadd.s32 %s162, 1
      %p166 = scmp.eq.s32.totalorder %s23, 1
      %p167 = scmp.ne.s32.totalorder %s162, %s164
      %p168 = scmp.eq.s32.totalorder %s23, 0
      %p169 = por %p167, %p168
      %p170 = scmp.ne.s32.totalorder %s162, %s164
      %p171 = scmp.eq.s32.totalorder %s28, 1
      %p172 = por %p170, %p171
      %p173 = scmp.ne.s32.totalorder %s164, %s165
      %p174 = scmp.eq.s32.totalorder %s28, 0
      %p175 = por %p173, %p174
      %p176 = scmp.ne.s32.totalorder %s164, %s165
      %p177 = scmp.eq.s32.totalorder %s29, 1
      %p178 = por %p176, %p177
      %p180 = scmp.ne.s32.totalorder %s165, %s179
      %p181 = scmp.eq.s32.totalorder %s29, 0
      %p182 = por %p180, %p181
      %s184 = sadd.s32 %s183, 1
      %p187 = scmp.eq.s32.totalorder %s23, 1
      %p188 = scmp.ne.s32.totalorder %s183, %s185
      %p189 = scmp.eq.s32.totalorder %s23, 0
      %p190 = por %p188, %p189
      %p191 = scmp.ne.s32.totalorder %s183, %s185
      %p192 = scmp.eq.s32.totalorder %s28, 1
      %p193 = por %p191, %p192
      %p194 = scmp.ne.s32.totalorder %s185, %s186
      %p195 = scmp.eq.s32.totalorder %s28, 0
      %p196 = por %p194, %p195
      %p197 = scmp.ne.s32.totalorder %s185, %s186
      %p198 = scmp.eq.s32.totalorder %s29, 1
      %p199 = por %p197, %p198
      %p201 = scmp.ne.s32.totalorder %s186, %s200
      %p202 = scmp.eq.s32.totalorder %s29, 0
      %p203 = por %p201, %p202
      %s205 = sadd.s32 %s204, 1
      %p208 = scmp.eq.s32.totalorder %s23, 1
      %p209 = scmp.ne.s32.totalorder %s204, %s206
      %p210 = scmp.eq.s32.totalorder %s23, 0
      %p211 = por %p209, %p210
      %p212 = scmp.ne.s32.totalorder %s204, %s206
      %p213 = scmp.eq.s32.totalorder %s28, 1
      %p214 = por %p212, %p213
      %p215 = scmp.ne.s32.totalorder %s206, %s207
      %p216 = scmp.eq.s32.totalorder %s28, 0
      %p217 = por %p215, %p216
      %p218 = scmp.ne.s32.totalorder %s206, %s207
      %p219 = scmp.eq.s32.totalorder %s29, 1
      %p220 = por %p218, %p219
      %p222 = scmp.ne.s32.totalorder %s207, %s221
      %p223 = scmp.eq.s32.totalorder %s29, 0
      %p224 = por %p222, %p223
      %s226 = sadd.s32 %s225, 1
      %p229 = scmp.eq.s32.totalorder %s23, 1
      %p230 = scmp.ne.s32.totalorder %s225, %s227
      %p231 = scmp.eq.s32.totalorder %s23, 0
      %p232 = por %p230, %p231
      %p233 = scmp.ne.s32.totalorder %s225, %s227
      %p234 = scmp.eq.s32.totalorder %s28, 1
      %p235 = por %p233, %p234
      %p236 = scmp.ne.s32.totalorder %s227, %s228
      %p237 = scmp.eq.s32.totalorder %s28, 0
      %p238 = por %p236, %p237
      %p239 = scmp.ne.s32.totalorder %s227, %s228
      %p240 = scmp.eq.s32.totalorder %s29, 1
      %p241 = por %p239, %p240
      %p243 = scmp.ne.s32.totalorder %s228, %s242
      %p244 = scmp.eq.s32.totalorder %s29, 0
      %p245 = por %p243, %p244
      %s247 = sadd.s32 %s246, 1
      %p250 = scmp.eq.s32.totalorder %s23, 1
      %p251 = scmp.ne.s32.totalorder %s246, %s248
      %p252 = scmp.eq.s32.totalorder %s23, 0
      %p253 = por %p251, %p252
      %p254 = scmp.ne.s32.totalorder %s246, %s248
      %p255 = scmp.eq.s32.totalorder %s28, 1
      %p256 = por %p254, %p255
      %p257 = scmp.ne.s32.totalorder %s248, %s249
      %p258 = scmp.eq.s32.totalorder %s28, 0
      %p259 = por %p257, %p258
      %p260 = scmp.ne.s32.totalorder %s248, %s249
      %p261 = scmp.eq.s32.totalorder %s29, 1
      %p262 = por %p260, %p261
      %p264 = scmp.ne.s32.totalorder %s249, %s263
      %p265 = scmp.eq.s32.totalorder %s29, 0
      %p266 = por %p264, %p265
      %s267 = ssub.s32 %s23, %s30
      %p268 = scmp.eq.s32.totalorder %s267, 0
      %s270 = sadd.s32 %s269, 1
      %s271 = scalar_select %p268, %s269, %s270
      %p274 = pneg %p268
      %p275 = scmp.eq.s32.totalorder %s23, 1
      %p276 = por %p274, %p275
      %p277 = scmp.ne.s32.totalorder %s269, %s272
      %p278 = scmp.eq.s32.totalorder %s23, 0
      %p279 = por %p277, %p278
      %p280 = scmp.ne.s32.totalorder %s269, %s272
      %p281 = scmp.eq.s32.totalorder %s28, 1
      %p282 = por %p280, %p281
      %p283 = scmp.ne.s32.totalorder %s272, %s273
      %p284 = scmp.eq.s32.totalorder %s28, 0
      %p285 = por %p283, %p284
      %p286 = scmp.ne.s32.totalorder %s272, %s273
      %p287 = scmp.eq.s32.totalorder %s29, 1
      %p288 = por %p286, %p287
      %p290 = scmp.ne.s32.totalorder %s273, %s289
      %p291 = scmp.eq.s32.totalorder %s29, 0
      %p292 = por %p290, %p291
      %p293 = scmp.le.s32.totalorder 1, %s23
      %p294 = scmp.lt.s32.totalorder %s23, 3
      %p295 = pnand %p293, %p294
      %p296 = pneg %p295
      // Predicated region
      $region9: #{rubiks_network.1} parent=5 // pred_check
        _
      $region10: #{rubiks_network.1} parent=5 // pred_check_branch
        %298 = sbr.rel (%p295) target = $region12
      $region11: #{rubiks_network.1} parent=5 // pred_region
        %s299 = ssub.s32 %s23, 1
        // Predicated region
        $region13: #{rubiks_network.1} parent=11 // pred_check
          %p300 = pneg %p70
        $region14: #{rubiks_network.1} parent=11 // pred_check_branch
          %302 = sbr.rel (%p300) target = $region16
        $region15: #{rubiks_network.1} parent=11 // pred_region
          %s304 = ssub.s32 448, 448
          %305 = vsyncadd [#allocation6], %s304
          %s306 = sshll.u32 [#allocation5], 4
          %s307 = int_to_ptr.vmem [resolvable:$true] %s306
          %312 = dma.hbm_to_vmem [thread:$0]  %s1, 448, %s307, [#allocation6], 64, 64, 4
        $region16: #{rubiks_network.1} parent=11 // pred_fallthru
          _
        // Predicated region
        $region17: #{rubiks_network.1} parent=11 // pred_check
          %p313 = pneg %p91
        $region18: #{rubiks_network.1} parent=11 // pred_check_branch
          %315 = sbr.rel (%p313) target = $region20
        $region19: #{rubiks_network.1} parent=11 // pred_region
          _
        $region20: #{rubiks_network.1} parent=11 // pred_fallthru
          _
        // Predicated region
        $region21: #{rubiks_network.1} parent=11 // pred_check
          %p316 = pneg %p112
        $region22: #{rubiks_network.1} parent=11 // pred_check_branch
          %318 = sbr.rel (%p316) target = $region24
        $region23: #{rubiks_network.1} parent=11 // pred_region
          %s320 = ssub.s32 1024, 1024
          %321 = vsyncadd [#allocation6], %s320
          %s322 = sshll.u32 [#allocation7], 4
          %s323 = int_to_ptr.vmem [resolvable:$true] %s322
          %328 = dma.hbm_to_vmem [thread:$0]  %s3, 1024, %s323, [#allocation6], 64, 64, 4
        $region24: #{rubiks_network.1} parent=11 // pred_fallthru
          _
        // Predicated region
        $region25: #{rubiks_network.1} parent=11 // pred_check
          %p329 = pneg %p133
        $region26: #{rubiks_network.1} parent=11 // pred_check_branch
          %331 = sbr.rel (%p329) target = $region28
        $region27: #{rubiks_network.1} parent=11 // pred_region
          _
        $region28: #{rubiks_network.1} parent=11 // pred_fallthru
          _
        // Predicated region
        $region29: #{rubiks_network.1} parent=11 // pred_check
          %p332 = pneg %p154
        $region30: #{rubiks_network.1} parent=11 // pred_check_branch
          %334 = sbr.rel (%p332) target = $region32
        $region31: #{rubiks_network.1} parent=11 // pred_region
          %s336 = ssub.s32 1024, 1024
          %337 = vsyncadd [#allocation9], %s336
          %s338 = sshll.u32 [#allocation8], 4
          %s339 = int_to_ptr.vmem [resolvable:$true] %s338
          %344 = dma.hbm_to_vmem [thread:$0]  %s5, 1024, %s339, [#allocation9], 64, 64, 4
        $region32: #{rubiks_network.1} parent=11 // pred_fallthru
          _
        // Predicated region
        $region33: #{rubiks_network.1} parent=11 // pred_check
          %p345 = pneg %p175
        $region34: #{rubiks_network.1} parent=11 // pred_check_branch
          %347 = sbr.rel (%p345) target = $region36
        $region35: #{rubiks_network.1} parent=11 // pred_region
          _
        $region36: #{rubiks_network.1} parent=11 // pred_fallthru
          _
        // Predicated region
        $region37: #{rubiks_network.1} parent=11 // pred_check
          %p348 = pneg %p196
        $region38: #{rubiks_network.1} parent=11 // pred_check_branch
          %350 = sbr.rel (%p348) target = $region40
        $region39: #{rubiks_network.1} parent=11 // pred_region
          %s352 = ssub.s32 1024, 1024
          %353 = vsyncadd [#allocation9], %s352
          %s354 = sshll.u32 [#allocation10], 4
          %s355 = int_to_ptr.vmem [resolvable:$true] %s354
          %360 = dma.hbm_to_vmem [thread:$0]  %s7, 1024, %s355, [#allocation9], 64, 64, 4
        $region40: #{rubiks_network.1} parent=11 // pred_fallthru
          _
        // Predicated region
        $region41: #{rubiks_network.1} parent=11 // pred_check
          %p361 = pneg %p217
        $region42: #{rubiks_network.1} parent=11 // pred_check_branch
          %363 = sbr.rel (%p361) target = $region44
        $region43: #{rubiks_network.1} parent=11 // pred_region
          _
        $region44: #{rubiks_network.1} parent=11 // pred_fallthru
          _
        // Predicated region
        $region45: #{rubiks_network.1} parent=11 // pred_check
          %p364 = pneg %p238
        $region46: #{rubiks_network.1} parent=11 // pred_check_branch
          %366 = sbr.rel (%p364) target = $region48
        $region47: #{rubiks_network.1} parent=11 // pred_region
          _
        $region48: #{rubiks_network.1} parent=11 // pred_fallthru
          _
        // Predicated region
        $region49: #{rubiks_network.1} parent=11 // pred_check
          %p367 = pneg %p259
        $region50: #{rubiks_network.1} parent=11 // pred_check_branch
          %369 = sbr.rel (%p367) target = $region52
        $region51: #{rubiks_network.1} parent=11 // pred_region
          _
        $region52: #{rubiks_network.1} parent=11 // pred_fallthru
          _
      $region12: #{rubiks_network.1} parent=5 // pred_fallthru
        _
      %p370 = scmp.lt.s32.totalorder %s23, 2
      // Predicated region
      $region53: #{rubiks_network.1} parent=5 // pred_check
        %p371 = pneg %p370
      $region54: #{rubiks_network.1} parent=5 // pred_check_branch
        %373 = sbr.rel (%p371) target = $region56
      $region55: #{rubiks_network.1} parent=5 // pred_region
        // Predicated region
        $region57: #{rubiks_network.1} parent=55 // pred_check
          %p374 = pneg %p43
        $region58: #{rubiks_network.1} parent=55 // pred_check_branch
          %376 = sbr.rel (%p374) target = $region60
        $region59: #{rubiks_network.1} parent=55 // pred_region
          %s377 = sand.u32 %s33, 1
          %s378 = scalar_lea.sflag [#allocation4], %s377
          %s379 = sand.u32 %s33, 1
          %s380 = smul.addr %s379, 8
          %s381 = scalar_lea.vmem [#allocation3], %s380
          %s383 = ssub.s32 128, 128
          %384 = vsyncadd %s378, %s383
          %s385 = smul.addr %s23, 128
          %s386 = scalar_lea.hbm %s0, %s385
          %s388 = sshll.u32 %s381, 4
          %s389 = int_to_ptr.vmem [resolvable:$true] %s388
          %391 = dma.hbm_to_vmem [thread:$0]  %s386, 128, %s389, %s378
        $region60: #{rubiks_network.1} parent=55 // pred_fallthru
          _
      $region56: #{rubiks_network.1} parent=5 // pred_fallthru
        _
      %p392 = scmp.le.s32.totalorder 1, %s23
      %p393 = scmp.lt.s32.totalorder %s23, 3
      %p394 = pnand %p392, %p393
      %p395 = pneg %p394
      // Predicated region
      $region61: #{rubiks_network.1} parent=5 // pred_check
        _
      $region62: #{rubiks_network.1} parent=5 // pred_check_branch
        %397 = sbr.rel (%p394) target = $region64
      $region63: #{rubiks_network.1} parent=5 // pred_region
        %s398 = ssub.s32 %s23, 1
        %s399 = sand.u32 %s36, 1
        %s400 = scalar_lea.sflag [#allocation4], %s399
        %s401 = sand.u32 %s36, 1
        %s402 = smul.addr %s401, 8
        %s403 = scalar_lea.vmem [#allocation3], %s402
        // Predicated region
        $region65: #{rubiks_network.1} parent=63 // pred_check
          %p404 = pneg %p49
        $region66: #{rubiks_network.1} parent=63 // pred_check_branch
          %406 = sbr.rel (%p404) target = $region68
        $region67: #{rubiks_network.1} parent=63 // pred_region
          %407 = dma.done %s400, 128
        $region68: #{rubiks_network.1} parent=63 // pred_fallthru
          _
        // Predicated region
        $region69: #{rubiks_network.1} parent=63 // pred_check
          %p408 = pneg %p70
        $region70: #{rubiks_network.1} parent=63 // pred_check_branch
          %410 = sbr.rel (%p408) target = $region72
        $region71: #{rubiks_network.1} parent=63 // pred_region
          %411 = dma.done [#allocation6], 448
        $region72: #{rubiks_network.1} parent=63 // pred_fallthru
          _
        // Predicated region
        $region73: #{rubiks_network.1} parent=63 // pred_check
          %p412 = pneg %p112
        $region74: #{rubiks_network.1} parent=63 // pred_check_branch
          %414 = sbr.rel (%p412) target = $region76
        $region75: #{rubiks_network.1} parent=63 // pred_region
          %415 = dma.done [#allocation6], 1024
        $region76: #{rubiks_network.1} parent=63 // pred_fallthru
          _
        // Predicated region
        $region77: #{rubiks_network.1} parent=63 // pred_check
          %p416 = pneg %p154
        $region78: #{rubiks_network.1} parent=63 // pred_check_branch
          %418 = sbr.rel (%p416) target = $region80
        $region79: #{rubiks_network.1} parent=63 // pred_region
          %419 = dma.done [#allocation9], 1024
        $region80: #{rubiks_network.1} parent=63 // pred_fallthru
          _
        // Predicated region
        $region81: #{rubiks_network.1} parent=63 // pred_check
          %p420 = pneg %p196
        $region82: #{rubiks_network.1} parent=63 // pred_check_branch
          %422 = sbr.rel (%p420) target = $region84
        $region83: #{rubiks_network.1} parent=63 // pred_region
          %423 = dma.done [#allocation9], 1024
        $region84: #{rubiks_network.1} parent=63 // pred_fallthru
          _
        %s424 = sand.u32 %s36, 1
        %s425 = scalar_lea.sflag [#allocation4], %s424
        %s426 = sand.u32 %s36, 1
        %s427 = smul.addr %s426, 8
        %s428 = scalar_lea.vmem [#allocation3], %s427
        %p429 = pneg %p49
        %p430 = pneg %p46
        %p431 = pneg %p70
        %p432 = pneg %p67
        %p433 = pneg %p91
        %p434 = pneg %p88
        %p435 = pneg %p112
        %p436 = pneg %p109
        %p437 = pneg %p133
        %p438 = pneg %p130
        %p439 = pneg %p154
        %p440 = pneg %p151
        %p441 = pneg %p175
        %p442 = pneg %p172
        %p443 = pneg %p196
        %p444 = pneg %p193
        %p445 = pneg %p217
        %p446 = pneg %p214
        %p447 = pneg %p238
        %p448 = pneg %p235
        %p449 = pneg %p259
        %p450 = pneg %p256
        %p451 = pneg %p285
        %p452 = pneg %p282
        %p453 = scmp.lt.s32.totalorder %s28, 1
        %s454 = scalar_select %p453, %s28, 1
        %s455 = smul.addr %s454, 8
        %s456 = scalar_lea.vmem %s11, %s455
        %p457 = scmp.lt.s32.totalorder %s28, 1
        %s458 = scalar_select %p457, %s28, 1
        %s459 = smul.addr %s458, 8
        %s460 = scalar_lea.vmem %s11, %s459
        %v462 = vld [vmem:[%s403] sm:$0xff]
        %v463 = vpack.c.bf16 %v462, %v462
        %v464 = vld [vmem:[#allocation5] sm:$0xf]
        %v465 = vld [vmem:[#allocation5 + $0x4] sm:$0xf]
        %v466 = vld [vmem:[#allocation5 + $0x8] sm:$0xf]
        %v467 = vld [vmem:[#allocation5 + $0xc] sm:$0xf]
        %v468 = vld [vmem:[#allocation5 + $0x10] sm:$0xf]
        %v469 = vld [vmem:[#allocation5 + $0x14] sm:$0xf]
        %v470 = vld [vmem:[#allocation5 + $0x18] sm:$0x7]
        %v471 = vld [vmem:[%s2] sm:$0x1]
        %v473 = vlaneseq
        %v474 = vshrl.u32 %v473, 7
        %v475 = vsub.s32 0, %v474
        %v476 = vrot.slane %v471, %v475
        %v485 = vunpack.c.l.b16 %v464
        %v486 = vunpack.c.l.b16 %v465
        %v487 = vunpack.c.l.b16 %v466
        %v488 = vunpack.c.l.b16 %v467
        %v489 = vunpack.c.l.b16 %v468
        %v490 = vunpack.c.l.b16 %v469
        %v491 = vunpack.c.l.b16 %v470
        %v492 = vpack.c.b16 %v486, %v485
        %v493 = vpack.c.b16 %v488, %v487
        %v494 = vpack.c.b16 %v490, %v489
        %v495 = vpack.c.b16 %v491, %v491
        %vm499 = vcmask 441344
        %v501 = vsel %vm499, %v463, 0
        %vm503 = vcmask 1042432
        %v505 = vsel %vm503, %v495, 0
        %507 = vmatprep.subr.bf16.mxu0 0
        %508 = vmatpush1.bf16.msra.mxu0 %v492
        %509 = vmatprep.subr.bf16.mxu0 0
        %510 = vmatpush1.bf16.msra.mxu0 %v493
        %511 = vmatprep.subr.bf16.mxu0 0
        %512 = vmatpush1.bf16.msra.mxu0 %v494
        %513 = vmatprep.subr.bf16.mxu0 0
        %514 = vmatpush1.bf16.msra.mxu0 %v505
        %515 = vmatprep.subr.bf16.mxu0 0
        %516 = vmatpush1.bf16.msra.mxu0 0
        %517 = vmatprep.subr.bf16.mxu0 0
        %518 = vmatpush1.bf16.msra.mxu0 0
        %519 = vmatprep.subr.bf16.mxu0 0
        %520 = vmatpush1.bf16.msra.mxu0 0
        %521 = vmatprep.subr.bf16.mxu0 0
        %522 = vmatpush1.bf16.msra.mxu0 0
        %523 = vmatprep.subr.bf16.mxu0 0
        %524 = vmatpush1.bf16.msra.mxu0 0
        %525 = vmatprep.subr.bf16.mxu0 0
        %526 = vmatpush1.bf16.msra.mxu0 0
        %527 = vmatprep.subr.bf16.mxu0 0
        %528 = vmatpush1.bf16.msra.mxu0 0
        %529 = vmatprep.subr.bf16.mxu0 0
        %530 = vmatpush1.bf16.msra.mxu0 0
        %531 = vmatprep.subr.bf16.mxu0 0
        %532 = vmatpush1.bf16.msra.mxu0 0
        %533 = vmatprep.subr.bf16.mxu0 0
        %534 = vmatpush1.bf16.msra.mxu0 0
        %535 = vmatprep.subr.bf16.mxu0 0
        %536 = vmatpush1.bf16.msra.mxu0 0
        %537 = vmatprep.subr.bf16.mxu0 0
        %538 = vmatpush1.bf16.msra.mxu0 0
        %539 = vmatprep.mubr.bf16.mxu0 0
        %540 = vmatmul.mubr.bf16.gmra.mrb[0].mxu0 %v501
        %v541 = vpop.f32.mrb[0].mxu0
        %v542 = vadd.f32 %v476, %v541
        %v543 = vpop.f32.mrb[0].mxu0
        %v544 = vpop.f32.mrb[0].mxu0
        %v545 = vpop.f32.mrb[0].mxu0
        %546 = vdwg.mxu0
        %v547 = vmax.f32 %v542, 0.0
        %v548 = vpack.c.bf16 %v547, %v547
        %v549 = vld [vmem:[#allocation7] sm:$0xf]
        %v550 = vld [vmem:[#allocation7 + $0x4] sm:$0xf]
        %v551 = vld [vmem:[#allocation7 + $0x8] sm:$0xf]
        %v552 = vld [vmem:[#allocation7 + $0xc] sm:$0xf]
        %v553 = vld [vmem:[#allocation7 + $0x10] sm:$0xf]
        %v554 = vld [vmem:[#allocation7 + $0x14] sm:$0xf]
        %v555 = vld [vmem:[#allocation7 + $0x18] sm:$0xf]
        %v556 = vld [vmem:[#allocation7 + $0x1c] sm:$0xf]
        %v557 = vld [vmem:[#allocation7 + $0x20] sm:$0xf]
        %v558 = vld [vmem:[#allocation7 + $0x24] sm:$0xf]
        %v559 = vld [vmem:[#allocation7 + $0x28] sm:$0xf]
        %v560 = vld [vmem:[#allocation7 + $0x2c] sm:$0xf]
        %v561 = vld [vmem:[#allocation7 + $0x30] sm:$0xf]
        %v562 = vld [vmem:[#allocation7 + $0x34] sm:$0xf]
        %v563 = vld [vmem:[#allocation7 + $0x38] sm:$0xf]
        %v564 = vld [vmem:[#allocation7 + $0x3c] sm:$0xf]
        %v565 = vld [vmem:[%s4] sm:$0x1]
        %v567 = vlaneseq
        %v568 = vshrl.u32 %v567, 7
        %v569 = vsub.s32 0, %v568
        %v570 = vrot.slane %v565, %v569
        %v588 = vunpack.c.l.b16 %v549
        %v589 = vunpack.c.l.b16 %v550
        %v590 = vunpack.c.l.b16 %v551
        %v591 = vunpack.c.l.b16 %v552
        %v592 = vunpack.c.l.b16 %v553
        %v593 = vunpack.c.l.b16 %v554
        %v594 = vunpack.c.l.b16 %v555
        %v595 = vunpack.c.l.b16 %v556
        %v596 = vunpack.c.l.b16 %v557
        %v597 = vunpack.c.l.b16 %v558
        %v598 = vunpack.c.l.b16 %v559
        %v599 = vunpack.c.l.b16 %v560
        %v600 = vunpack.c.l.b16 %v561
        %v601 = vunpack.c.l.b16 %v562
        %v602 = vunpack.c.l.b16 %v563
        %v603 = vunpack.c.l.b16 %v564
        %v604 = vpack.c.b16 %v589, %v588
        %v605 = vpack.c.b16 %v591, %v590
        %v606 = vpack.c.b16 %v593, %v592
        %v607 = vpack.c.b16 %v595, %v594
        %v608 = vpack.c.b16 %v597, %v596
        %v609 = vpack.c.b16 %v599, %v598
        %v610 = vpack.c.b16 %v601, %v600
        %v611 = vpack.c.b16 %v603, %v602
        %620 = vmatprep.subr.bf16.mxu0 0
        %621 = vmatpush1.bf16.msra.mxu0 %v604
        %622 = vmatprep.subr.bf16.mxu0 0
        %623 = vmatpush1.bf16.msra.mxu0 %v605
        %624 = vmatprep.subr.bf16.mxu0 0
        %625 = vmatpush1.bf16.msra.mxu0 %v606
        %626 = vmatprep.subr.bf16.mxu0 0
        %627 = vmatpush1.bf16.msra.mxu0 %v607
        %628 = vmatprep.subr.bf16.mxu0 0
        %629 = vmatpush1.bf16.msra.mxu0 %v608
        %630 = vmatprep.subr.bf16.mxu0 0
        %631 = vmatpush1.bf16.msra.mxu0 %v609
        %632 = vmatprep.subr.bf16.mxu0 0
        %633 = vmatpush1.bf16.msra.mxu0 %v610
        %634 = vmatprep.subr.bf16.mxu0 0
        %635 = vmatpush1.bf16.msra.mxu0 %v611
        %636 = vmatprep.subr.bf16.mxu0 0
        %637 = vmatpush1.bf16.msra.mxu0 0
        %638 = vmatprep.subr.bf16.mxu0 0
        %639 = vmatpush1.bf16.msra.mxu0 0
        %640 = vmatprep.subr.bf16.mxu0 0
        %641 = vmatpush1.bf16.msra.mxu0 0
        %642 = vmatprep.subr.bf16.mxu0 0
        %643 = vmatpush1.bf16.msra.mxu0 0
        %644 = vmatprep.subr.bf16.mxu0 0
        %645 = vmatpush1.bf16.msra.mxu0 0
        %646 = vmatprep.subr.bf16.mxu0 0
        %647 = vmatpush1.bf16.msra.mxu0 0
        %648 = vmatprep.subr.bf16.mxu0 0
        %649 = vmatpush1.bf16.msra.mxu0 0
        %650 = vmatprep.subr.bf16.mxu0 0
        %651 = vmatpush1.bf16.msra.mxu0 0
        %652 = vmatprep.mubr.bf16.mxu0 0
        %653 = vmatmul.mubr.bf16.gmra.mrb[0].mxu0 %v548
        %v654 = vpop.f32.mrb[0].mxu0
        %v655 = vadd.f32 %v570, %v654
        %v656 = vpop.f32.mrb[0].mxu0
        %v657 = vpop.f32.mrb[0].mxu0
        %v658 = vpop.f32.mrb[0].mxu0
        %659 = vdwg.mxu0
        %v660 = vmax.f32 %v655, 0.0
        %v661 = vpack.c.bf16 %v660, %v660
        %v662 = vld [vmem:[#allocation8] sm:$0xf]
        %v663 = vld [vmem:[#allocation8 + $0x4] sm:$0xf]
        %v664 = vld [vmem:[#allocation8 + $0x8] sm:$0xf]
        %v665 = vld [vmem:[#allocation8 + $0xc] sm:$0xf]
        %v666 = vld [vmem:[#allocation8 + $0x10] sm:$0xf]
        %v667 = vld [vmem:[#allocation8 + $0x14] sm:$0xf]
        %v668 = vld [vmem:[#allocation8 + $0x18] sm:$0xf]
        %v669 = vld [vmem:[#allocation8 + $0x1c] sm:$0xf]
        %v670 = vld [vmem:[#allocation8 + $0x20] sm:$0xf]
        %v671 = vld [vmem:[#allocation8 + $0x24] sm:$0xf]
        %v672 = vld [vmem:[#allocation8 + $0x28] sm:$0xf]
        %v673 = vld [vmem:[#allocation8 + $0x2c] sm:$0xf]
        %v674 = vld [vmem:[#allocation8 + $0x30] sm:$0xf]
        %v675 = vld [vmem:[#allocation8 + $0x34] sm:$0xf]
        %v676 = vld [vmem:[#allocation8 + $0x38] sm:$0xf]
        %v677 = vld [vmem:[#allocation8 + $0x3c] sm:$0xf]
        %v678 = vld [vmem:[%s6] sm:$0x1]
        %v680 = vlaneseq
        %v681 = vshrl.u32 %v680, 7
        %v682 = vsub.s32 0, %v681
        %v683 = vrot.slane %v678, %v682
        %v701 = vunpack.c.l.b16 %v662
        %v702 = vunpack.c.l.b16 %v663
        %v703 = vunpack.c.l.b16 %v664
        %v704 = vunpack.c.l.b16 %v665
        %v705 = vunpack.c.l.b16 %v666
        %v706 = vunpack.c.l.b16 %v667
        %v707 = vunpack.c.l.b16 %v668
        %v708 = vunpack.c.l.b16 %v669
        %v709 = vunpack.c.l.b16 %v670
        %v710 = vunpack.c.l.b16 %v671
        %v711 = vunpack.c.l.b16 %v672
        %v712 = vunpack.c.l.b16 %v673
        %v713 = vunpack.c.l.b16 %v674
        %v714 = vunpack.c.l.b16 %v675
        %v715 = vunpack.c.l.b16 %v676
        %v716 = vunpack.c.l.b16 %v677
        %v717 = vpack.c.b16 %v702, %v701
        %v718 = vpack.c.b16 %v704, %v703
        %v719 = vpack.c.b16 %v706, %v705
        %v720 = vpack.c.b16 %v708, %v707
        %v721 = vpack.c.b16 %v710, %v709
        %v722 = vpack.c.b16 %v712, %v711
        %v723 = vpack.c.b16 %v714, %v713
        %v724 = vpack.c.b16 %v716, %v715
        %733 = vmatprep.subr.bf16.mxu0 0
        %734 = vmatpush1.bf16.msra.mxu0 %v717
        %735 = vmatprep.subr.bf16.mxu0 0
        %736 = vmatpush1.bf16.msra.mxu0 %v718
        %737 = vmatprep.subr.bf16.mxu0 0
        %738 = vmatpush1.bf16.msra.mxu0 %v719
        %739 = vmatprep.subr.bf16.mxu0 0
        %740 = vmatpush1.bf16.msra.mxu0 %v720
        %741 = vmatprep.subr.bf16.mxu0 0
        %742 = vmatpush1.bf16.msra.mxu0 %v721
        %743 = vmatprep.subr.bf16.mxu0 0
        %744 = vmatpush1.bf16.msra.mxu0 %v722
        %745 = vmatprep.subr.bf16.mxu0 0
        %746 = vmatpush1.bf16.msra.mxu0 %v723
        %747 = vmatprep.subr.bf16.mxu0 0
        %748 = vmatpush1.bf16.msra.mxu0 %v724
        %749 = vmatprep.subr.bf16.mxu0 0
        %750 = vmatpush1.bf16.msra.mxu0 0
        %751 = vmatprep.subr.bf16.mxu0 0
        %752 = vmatpush1.bf16.msra.mxu0 0
        %753 = vmatprep.subr.bf16.mxu0 0
        %754 = vmatpush1.bf16.msra.mxu0 0
        %755 = vmatprep.subr.bf16.mxu0 0
        %756 = vmatpush1.bf16.msra.mxu0 0
        %757 = vmatprep.subr.bf16.mxu0 0
        %758 = vmatpush1.bf16.msra.mxu0 0
        %759 = vmatprep.subr.bf16.mxu0 0
        %760 = vmatpush1.bf16.msra.mxu0 0
        %761 = vmatprep.subr.bf16.mxu0 0
        %762 = vmatpush1.bf16.msra.mxu0 0
        %763 = vmatprep.subr.bf16.mxu0 0
        %764 = vmatpush1.bf16.msra.mxu0 0
        %765 = vmatprep.mubr.bf16.mxu0 0
        %766 = vmatmul.mubr.bf16.gmra.mrb[0].mxu0 %v661
        %v767 = vpop.f32.mrb[0].mxu0
        %v768 = vadd.f32 %v683, %v767
        %v769 = vpop.f32.mrb[0].mxu0
        %v770 = vpop.f32.mrb[0].mxu0
        %v771 = vpop.f32.mrb[0].mxu0
        %772 = vdwg.mxu0
        %v773 = vmax.f32 %v768, 0.0
        %v774 = vpack.c.bf16 %v773, %v773
        %v775 = vld [vmem:[#allocation10] sm:$0xf]
        %v776 = vld [vmem:[#allocation10 + $0x4] sm:$0xf]
        %v777 = vld [vmem:[#allocation10 + $0x8] sm:$0xf]
        %v778 = vld [vmem:[#allocation10 + $0xc] sm:$0xf]
        %v779 = vld [vmem:[#allocation10 + $0x10] sm:$0xf]
        %v780 = vld [vmem:[#allocation10 + $0x14] sm:$0xf]
        %v781 = vld [vmem:[#allocation10 + $0x18] sm:$0xf]
        %v782 = vld [vmem:[#allocation10 + $0x1c] sm:$0xf]
        %v783 = vld [vmem:[#allocation10 + $0x20] sm:$0xf]
        %v784 = vld [vmem:[#allocation10 + $0x24] sm:$0xf]
        %v785 = vld [vmem:[#allocation10 + $0x28] sm:$0xf]
        %v786 = vld [vmem:[#allocation10 + $0x2c] sm:$0xf]
        %v787 = vld [vmem:[#allocation10 + $0x30] sm:$0xf]
        %v788 = vld [vmem:[#allocation10 + $0x34] sm:$0xf]
        %v789 = vld [vmem:[#allocation10 + $0x38] sm:$0xf]
        %v790 = vld [vmem:[#allocation10 + $0x3c] sm:$0xf]
        %v791 = vld [vmem:[%s8] sm:$0x1]
        %v793 = vlaneseq
        %v794 = vshrl.u32 %v793, 7
        %v795 = vsub.s32 0, %v794
        %v796 = vrot.slane %v791, %v795
        %v814 = vunpack.c.l.b16 %v775
        %v815 = vunpack.c.l.b16 %v776
        %v816 = vunpack.c.l.b16 %v777
        %v817 = vunpack.c.l.b16 %v778
        %v818 = vunpack.c.l.b16 %v779
        %v819 = vunpack.c.l.b16 %v780
        %v820 = vunpack.c.l.b16 %v781
        %v821 = vunpack.c.l.b16 %v782
        %v822 = vunpack.c.l.b16 %v783
        %v823 = vunpack.c.l.b16 %v784
        %v824 = vunpack.c.l.b16 %v785
        %v825 = vunpack.c.l.b16 %v786
        %v826 = vunpack.c.l.b16 %v787
        %v827 = vunpack.c.l.b16 %v788
        %v828 = vunpack.c.l.b16 %v789
        %v829 = vunpack.c.l.b16 %v790
        %v830 = vpack.c.b16 %v815, %v814
        %v831 = vpack.c.b16 %v817, %v816
        %v832 = vpack.c.b16 %v819, %v818
        %v833 = vpack.c.b16 %v821, %v820
        %v834 = vpack.c.b16 %v823, %v822
        %v835 = vpack.c.b16 %v825, %v824
        %v836 = vpack.c.b16 %v827, %v826
        %v837 = vpack.c.b16 %v829, %v828
        %846 = vmatprep.subr.bf16.mxu0 0
        %847 = vmatpush1.bf16.msra.mxu0 %v830
        %848 = vmatprep.subr.bf16.mxu0 0
        %849 = vmatpush1.bf16.msra.mxu0 %v831
        %850 = vmatprep.subr.bf16.mxu0 0
        %851 = vmatpush1.bf16.msra.mxu0 %v832
        %852 = vmatprep.subr.bf16.mxu0 0
        %853 = vmatpush1.bf16.msra.mxu0 %v833
        %854 = vmatprep.subr.bf16.mxu0 0
        %855 = vmatpush1.bf16.msra.mxu0 %v834
        %856 = vmatprep.subr.bf16.mxu0 0
        %857 = vmatpush1.bf16.msra.mxu0 %v835
        %858 = vmatprep.subr.bf16.mxu0 0
        %859 = vmatpush1.bf16.msra.mxu0 %v836
        %860 = vmatprep.subr.bf16.mxu0 0
        %861 = vmatpush1.bf16.msra.mxu0 %v837
        %862 = vmatprep.subr.bf16.mxu0 0
        %863 = vmatpush1.bf16.msra.mxu0 0
        %864 = vmatprep.subr.bf16.mxu0 0
        %865 = vmatpush1.bf16.msra.mxu0 0
        %866 = vmatprep.subr.bf16.mxu0 0
        %867 = vmatpush1.bf16.msra.mxu0 0
        %868 = vmatprep.subr.bf16.mxu0 0
        %869 = vmatpush1.bf16.msra.mxu0 0
        %870 = vmatprep.subr.bf16.mxu0 0
        %871 = vmatpush1.bf16.msra.mxu0 0
        %872 = vmatprep.subr.bf16.mxu0 0
        %873 = vmatpush1.bf16.msra.mxu0 0
        %874 = vmatprep.subr.bf16.mxu0 0
        %875 = vmatpush1.bf16.msra.mxu0 0
        %876 = vmatprep.subr.bf16.mxu0 0
        %877 = vmatpush1.bf16.msra.mxu0 0
        %878 = vmatprep.mubr.bf16.mxu0 0
        %879 = vmatmul.mubr.bf16.gmra.mrb[0].mxu0 %v774
        %v880 = vpop.f32.mrb[0].mxu0
        %v881 = vadd.f32 %v796, %v880
        %v882 = vpop.f32.mrb[0].mxu0
        %v883 = vpop.f32.mrb[0].mxu0
        %v884 = vpop.f32.mrb[0].mxu0
        %885 = vdwg.mxu0
        %v886 = vadd.f32 %v881, %v660
        %v887 = vmax.f32 %v886, 0.0
        %v888 = vld [vmem:[%s9] sm:$0x1]
        %v890 = vlaneseq
        %v891 = vshrl.u32 %v890, 7
        %v892 = vsub.s32 0, %v891
        %v893 = vrot.slane %v888, %v892
        %v895 = vmul.f32 %v887, %v893
        %896 = vadd.xlane.f32.xlu0 %v895
        %v897 = vpop.xlane.xlu0 %896
        %s898 = sld [smem:[#allocation2]]
        %v899 = vstv %s898
        %v900 = vadd.f32 %v897, %v899
        %vm901 = vcmask 7168
        %902 = vst.msk [vmem:[%s460] sm:$0xff] %vm901, %v900
        %p903 = scmp.lt.s32.totalorder %s28, 1
        %s904 = scalar_select %p903, %s28, 1
        %s905 = smul.addr %s904, 8
        %s906 = scalar_lea.vmem %s11, %s905
        // Predicated region
        $region85: #{rubiks_network.1} parent=63 // pred_check
          %p907 = pneg %p282
        $region86: #{rubiks_network.1} parent=63 // pred_check_branch
          %909 = sbr.rel (%p907) target = $region88
        $region87: #{rubiks_network.1} parent=63 // pred_region
          _
        $region88: #{rubiks_network.1} parent=63 // pred_fallthru
          _
      $region64: #{rubiks_network.1} parent=5 // pred_fallthru
        _
      %p910 = scmp.le.s32.totalorder 2, %s23
      // Predicated region
      $region89: #{rubiks_network.1} parent=5 // pred_check
        %p911 = pneg %p910
      $region90: #{rubiks_network.1} parent=5 // pred_check_branch
        %913 = sbr.rel (%p911) target = $region92
      $region91: #{rubiks_network.1} parent=5 // pred_region
        %s914 = ssub.s32 %s23, 2
        // Predicated region
        $region93: #{rubiks_network.1} parent=91 // pred_check
          %p915 = pneg %p288
        $region94: #{rubiks_network.1} parent=91 // pred_check_branch
          %917 = sbr.rel (%p915) target = $region96
        $region95: #{rubiks_network.1} parent=91 // pred_region
          %p918 = scmp.lt.s32.totalorder %s29, 1
          %s919 = scalar_select %p918, %s29, 1
          %s920 = smul.addr %s919, 8
          %s921 = scalar_lea.vmem %s11, %s920
        $region96: #{rubiks_network.1} parent=91 // pred_fallthru
          _
      $region92: #{rubiks_network.1} parent=5 // pred_fallthru
        _
    $region6: #{rubiks_network.1} parent=1 // loop_footer
      %s27 = sadd.s32 1, %s23
    $region7: #{rubiks_network.1} parent=1 // loop_footer_branch
      %22 = sbr.rel target = $region3
    $region8: #{rubiks_network.1} parent=1 // loop_exit
      _
    %922 = vsyncpa [#allocation4], 1
    %s923 = scalar_lea.sflag [#allocation4], 1
    %924 = vsyncpa %s923, 1
    %925 = vsyncpa [#allocation6], 1
    %926 = vsyncpa [#allocation9], 1

</llo_original>
